<compile_context>
chip_gen: v7x
topology: tpu7x:2x2x1
jax: 0.10.0
libtpu: 0.0.40
codegen_flags: <defaults>
</compile_context>

<pallas_src>
import math

import jax
import jax.numpy as jnp
from jax.experimental import pallas as pl
from jax.experimental.pallas import tpu as pltpu


def _round_up(x, m):
    return ((x + m - 1) // m) * m


def _functional_rel_kernel(xn_ref, gmw_ref, o_ref):
    """One grid step: one graph (grid axis 0) x one tile of sample rows (axis 1).

    xn_ref:  (1, tS, N)   X @ M^T  (per-node feature sums of the samples)
    gmw_ref: (1, N, Dp)   G @ (M @ W) for this graph, lane-padded to Dp
    o_ref:   (tS, Dp)     output tile = (X M^T) (G M W)
    """
    xn = xn_ref[0]                                            # (tS, N)
    gmw = gmw_ref[0]                                          # (N, Dp)
    o_ref[...] = jnp.dot(xn, gmw,
                         preferred_element_type=jnp.float32).astype(o_ref.dtype)


def make_stacked_key_masks(shapes):
    """Deterministic equivalent of TensorToTensorDictTransform.stacked_key_masks().

    Returns (N, D) float32 matrix with ones marking which flat feature dims
    belong to each node (node order == graph node order), plus per-node dims.
    """
    names = list(shapes.keys())
    dims = [int(math.prod(shapes[k])) for k in names]
    total = sum(dims)
    mask = jnp.zeros((len(names), total), dtype=jnp.float32)
    start = 0
    for i, d in enumerate(dims):
        mask = mask.at[i, start:start + d].set(1.0)
        start += d
    return mask, dims


def _pick_tile_and_vmem(d_pad, n_nodes, s_dim, b_dim):
    """Choose the S tile and the scoped-VMEM limit from the output width and
    the device generation (the kernel is HBM-write bound; tile size is the
    main lever)."""
    try:
        kind = jax.devices()[0].device_kind.lower()
    except Exception:  # pragma: no cover - trace-time fallback
        kind = ""
    if "v7" in kind:
        budget = 44 * 1024 * 1024          # 64 MiB physical on v7x
    else:
        budget = 96 * 1024 * 1024          # 128 MiB physical on v5e/v6e

    n_lanes = _round_up(max(n_nodes, 1), 128)
    fixed = 2 * n_nodes * d_pad * 4        # double-buffered gmw block
    t_s = 8
    for cand in (2048, 1024, 512, 256, 128, 64, 32, 16, 8):
        need = 2 * cand * d_pad * 4 + 2 * cand * n_lanes * 4 + fixed
        if need <= budget:
            t_s = cand
            break

    # Never tile wider than the (8-rounded) sample count: no point writing
    # a mostly-padding tile.
    s_ceil = _round_up(s_dim, 8)
    t_s = min(t_s, s_ceil)

    # With B == 1, keep at least 2 grid steps so both v7x TensorCores get work.
    if b_dim == 1 and t_s >= s_ceil and s_ceil > 8:
        t_s = max(8, _round_up(t_s // 2, 8))

    return t_s, budget


def functional_relationships_forward(samples, graphs, shapes, linear_coefficients,
                                     *, out_dtype=jnp.float32):
    """samples: dict name -> array of shape (S, B_graph) + node_shape
       graphs:  (B_graph, N, N)
       returns: dict name -> array of shape (S, B_graph) + node_shape
    """
    names = list(shapes.keys())
    node_dims = [int(math.prod(shapes[k])) for k in names]
    n_nodes = len(names)
    total_dim = sum(node_dims)

    first = samples[names[0]]
    s_dim, b_dim = int(first.shape[0]), int(first.shape[1])

    # ---- X @ M^T : per-node feature sums, (B, S, N). Tiny tensor. ----------
    xn_cols = []
    for i, k in enumerate(names):
        xi = samples[k].reshape(s_dim, b_dim, node_dims[i]).astype(jnp.float32)
        xn_cols.append(jnp.sum(xi, axis=-1))              # (S, B)
    xn = jnp.stack(xn_cols, axis=-1)                      # (S, B, N)
    xn = jnp.transpose(xn, (1, 0, 2))                     # (B, S, N)

    # ---- G @ (M @ W) : per-graph (N, Dp), lane-padded to a multiple of 128 --
    w = linear_coefficients.astype(jnp.float32)
    mw_rows = []
    start = 0
    for d in node_dims:
        mw_rows.append(jnp.sum(w[start:start + d], axis=0))
        start += d
    mw = jnp.stack(mw_rows, axis=0)                       # (N, D)
    d_pad = _round_up(total_dim, 128)
    mw_pad = jnp.zeros((n_nodes, d_pad), jnp.float32).at[:, :total_dim].set(mw)
    graphs_f = graphs.astype(jnp.float32)
    gmw = jnp.einsum("bij,jk->bik", graphs_f, mw_pad)     # (B, N, Dp)  tiny

    # ---- choose S tile from the VMEM budget, pad S up to a tile multiple ---
    t_s, vmem_limit = _pick_tile_and_vmem(d_pad, n_nodes, s_dim, b_dim)
    s_pad = _round_up(s_dim, t_s)
    if s_pad != s_dim:
        xn = jnp.pad(xn, ((0, 0), (0, s_pad - s_dim), (0, 0)))

    grid = (b_dim, s_pad // t_s)

    cost = pl.CostEstimate(
        flops=2 * s_pad * b_dim * n_nodes * d_pad,
        transcendentals=0,
        bytes_accessed=(s_pad * b_dim * d_pad * jnp.dtype(out_dtype).itemsize
                        + b_dim * n_nodes * d_pad * 4
                        + b_dim * s_pad * n_nodes * 4),
    )

    out = pl.pallas_call(
        _functional_rel_kernel,
        out_shape=jax.ShapeDtypeStruct((s_pad, b_dim * d_pad), out_dtype),
        grid_spec=pltpu.PrefetchScalarGridSpec(
            num_scalar_prefetch=0,
            grid=grid,
            in_specs=[
                pl.BlockSpec((1, t_s, n_nodes), lambda b, s: (b, s, 0)),
                pl.BlockSpec((1, n_nodes, d_pad), lambda b, s: (b, 0, 0)),
            ],
            out_specs=pl.BlockSpec((t_s, d_pad), lambda b, s: (s, b)),
        ),
        compiler_params=pltpu.CompilerParams(
            dimension_semantics=("parallel", "parallel"),
            vmem_limit_bytes=vmem_limit,
        ),
        cost_estimate=cost,
    )(xn, gmw)

    # (S_pad, B*Dp) -> (S, B, Dp): free reshape + row slice; no transpose.
    out = out.reshape(s_pad, b_dim, d_pad)[:s_dim]

    # glue: unstack back into the TensorDict (tensor_to_td forward)
    result = {}
    start = 0
    for i, k in enumerate(names):
        d = node_dims[i]
        result[k] = out[:, :, start:start + d].reshape(
            (s_dim, b_dim) + tuple(shapes[k]))
        start += d
    return result


def _reference(samples, graphs, shapes, linear_coefficients):
    mask, node_dims = make_stacked_key_masks(shapes)
    names = list(shapes.keys())
    flat = [samples[k].reshape(samples[k].shape[:2] + (node_dims[i],))
            for i, k in enumerate(names)]
    x = jnp.concatenate(flat, axis=-1)                                   # (S, B, D)
    masked_graph = jnp.einsum("ji,bjk,kl->bil", mask, graphs.astype(jnp.float32), mask)
    out = jnp.einsum("sbi,bij,jk->sbk", x, masked_graph, linear_coefficients)
    result = {}
    start = 0
    for i, k in enumerate(names):
        d = node_dims[i]
        result[k] = out[..., start:start + d].reshape(
            (x.shape[0], x.shape[1]) + tuple(shapes[k]))
        start += d
    return result


if __name__ == "__main__":
    # small, deterministic setup
    shapes = {"x0": (8,), "x1": (16,), "x2": (8,)}       # N=3 nodes, D=32 total
    n_nodes = len(shapes)
    total_dim = sum(int(math.prod(s)) for s in shapes.values())
    S, B = 8, 2                                          # sample_shape = (S, B_graph)

    key = jax.random.PRNGKey(0)
    ks = jax.random.split(key, 5)

    samples = {
        "x0": jax.random.normal(ks[0], (S, B, 8), dtype=jnp.float32),
        "x1": jax.random.normal(ks[1], (S, B, 16), dtype=jnp.float32),
        "x2": jax.random.normal(ks[2], (S, B, 8), dtype=jnp.float32),
    }
    # binary adjacency graphs, zero diagonal
    graphs = (jax.random.uniform(ks[3], (B, n_nodes, n_nodes)) > 0.5).astype(jnp.float32)
    graphs = graphs * (1.0 - jnp.eye(n_nodes, dtype=jnp.float32))
    # deterministic "linear coefficient" parameter (D, D)
    linear_coefficients = jax.random.normal(ks[4], (total_dim, total_dim),
                                            dtype=jnp.float32) / jnp.sqrt(total_dim)

    out = functional_relationships_forward(samples, graphs, shapes, linear_coefficients)
    out = jax.tree_util.tree_map(jax.block_until_ready, out)

    ref = _reference(samples, graphs, shapes, linear_coefficients)
    for k in shapes:
        assert out[k].shape == (S, B) + tuple(shapes[k]), (k, out[k].shape)
        assert jnp.allclose(out[k], ref[k], atol=1e-4, rtol=1e-4), k

    # TODO(synk): the abstract base class defines no concrete forward; this kernel
    # implements the canonical linear functional-relationship forward built on the
    # base class's stacked_key_masks / TensorToTensorDictTransform machinery.
    print("KERNEL_OK")
</pallas_src>

<mosaic_0001>
module attributes {stable_mosaic.version = 11 : i64} {
  func.func @_functional_rel_kernel(%arg0: i32, %arg1: i32, %arg2: memref<1x8x3xf32, #tpu.memory_space<vmem>>, %arg3: memref<1x3x128xf32, #tpu.memory_space<vmem>>, %arg4: memref<8x128xf32, #tpu.memory_space<vmem>>) attributes {dimension_semantics = [#tpu.dimension_semantics<parallel>, #tpu.dimension_semantics<parallel>], iteration_bounds = array<i64: 2, 1>, scalar_prefetch = 0 : i64, scratch_operands = 0 : i64, tpu.core_type = #tpu.core_type<tc>, window_params = [{transform_indices = @transform_0, window_bounds = array<i64: 1, 8, 3>}, {transform_indices = @transform_1, window_bounds = array<i64: 1, 3, 128>}, {transform_indices = @transform_2, window_bounds = array<i64: 8, 128>}]} {
    %c0 = arith.constant 0 : index
    %c0_0 = arith.constant 0 : index
    %c0_1 = arith.constant 0 : index
    %0 = vector.load %arg2[%c0, %c0_0, %c0_1] : memref<1x8x3xf32, #tpu.memory_space<vmem>>, vector<1x8x3xf32>
    %1 = vector.shape_cast %0 : vector<1x8x3xf32> to vector<8x3xf32>
    %c0_2 = arith.constant 0 : index
    %c0_3 = arith.constant 0 : index
    %c0_4 = arith.constant 0 : index
    %2 = vector.load %arg3[%c0_2, %c0_3, %c0_4] : memref<1x3x128xf32, #tpu.memory_space<vmem>>, vector<1x3x128xf32>
    %3 = vector.shape_cast %2 : vector<1x3x128xf32> to vector<3x128xf32>
    %cst = arith.constant dense<0.000000e+00> : vector<8x128xf32>
    %4 = tpu.matmul %1, %3, %cst {dimension_numbers = #tpu.dot_dimension_numbers<[1], [0], [0], [1], [0, 0, 1, 1], [], []>} : vector<8x3xf32>, vector<3x128xf32>, vector<8x128xf32> -> vector<8x128xf32>
    %c0_5 = arith.constant 0 : index
    %c0_6 = arith.constant 0 : index
    %5 = vector.load %arg4[%c0_5, %c0_6] : memref<8x128xf32, #tpu.memory_space<vmem>>, vector<8x128xf32>
    tpu.vector_store %arg4[%c0_5, %c0_6], %4 {strides = array<i32>} : memref<8x128xf32, #tpu.memory_space<vmem>>, vector<8x128xf32>,
    return
  }
  func.func @transform_0(%arg0: i32, %arg1: i32) -> (i32, i32, i32) {
    %c0_i32 = arith.constant 0 : i32
    %c0_i32_0 = arith.constant 0 : i32
    return %arg0, %arg1, %c0_i32 : i32, i32, i32
  }
  func.func @transform_1(%arg0: i32, %arg1: i32) -> (i32, i32, i32) {
    %c0_i32 = arith.constant 0 : i32
    %c0_i32_0 = arith.constant 0 : i32
    %c0_i32_1 = arith.constant 0 : i32
    return %arg0, %c0_i32, %c0_i32_0 : i32, i32, i32
  }
  func.func @transform_2(%arg0: i32, %arg1: i32) -> (i32, i32) {
    %c0_i32 = arith.constant 0 : i32
    return %arg1, %arg0 : i32, i32
  }
}

</mosaic_0001>

<llo_original>
// kernel: tpu_custom_call.1
$region0: #{tpu_custom_call.1}
  #allocation0 [shape = 'u32[]', space=smem, size = 0x4, offset = 0x4, fixed_abs, tag = 'smem constant byte address 0x4 - core index']
  #allocation1 [shape = 'u32[144,128]{1,0:T(1,128)}', space=vmem, size = 0x12000, scoped, tag = 'internal scratch']
  %s0 = inlined_call_operand.hbm [shape: f32[2,8,3], index: 0, kind: input, shape index: {}]
  %s1 = inlined_call_operand.hbm [shape: f32[2,3,128], index: 1, kind: input, shape index: {}]
  %s2 = inlined_call_operand.hbm [shape: f32[8,256], index: 2, kind: output, shape index: {}]
  %s3 = sld [smem:[#allocation0]]
  $region49: #{tpu_custom_call.1} parent=0
    _
  %s5 = ssub.s32 1, %s3
  %s6 = scalar_select 0, %s5, %s3
  $region1: #{tpu_custom_call.1} parent=0
    #allocation2 [shape = 'u8[8192]{0}', space=vmem, size = 0x2000, scoped, tag = 'input window, operand 0']
    #allocation3 [shape = 's32[2]{0}', space=sflag, size = 0x8, scoped, tag = 'scoped memory for tpu_custom_call.1']
    #allocation4 [shape = 's32[2]{0}', space=sflag, size = 0x8, scoped, tag = 'scoped memory for tpu_custom_call.1']
    #allocation5 [shape = 'u8[4096]{0}', space=vmem, size = 0x1000, scoped, tag = 'input window, operand 1']
    #allocation6 [shape = 's32[2]{0}', space=sflag, size = 0x8, scoped, tag = 'scoped memory for tpu_custom_call.1']
    #allocation7 [shape = 'u8[8192]{0}', space=vmem, size = 0x2000, scoped, tag = 'output window, operand 0']
    %7 = vsyncpa [#allocation3], 0
    %s8 = scalar_lea.sflag [#allocation3], 1
    %9 = vsyncpa %s8, 0
    %10 = vsyncpa [#allocation6], 0
    %s11 = scalar_lea.sflag [#allocation6], 1
    %12 = vsyncpa %s11, 0
    %13 = vsyncpa [#allocation4], 0
    %s14 = scalar_lea.sflag [#allocation4], 1
    %15 = vsyncpa %s14, 0
    loop: start=0, step=1, limit=4
    $region2: #{tpu_custom_call.1} parent=1 // loop_pre_header
      _
    $region3: #{tpu_custom_call.1} parent=1 // loop_header
      %s17 = sphi 0, %s21
      %p18 = scmp.ge.s32.totalorder %s17, 4
      %s24 = sphi 0, %s36
      %s25 = sphi 0, %s32
      %s26 = sphi 0, %s24
      %s27 = sphi 0, %s25
      %s28 = sphi 0, %s26
      %s29 = sphi 0, %s27
      %s41 = sphi 0, %s43
      %s44 = sphi 0, %s41
      %s45 = sphi 0, %s44
      %s61 = sphi 0, %s45
      %s67 = sphi 0, %s69
      %s70 = sphi 0, %s67
      %s71 = sphi 0, %s70
      %s87 = sphi 0, %s71
      %s95 = sphi 0, %s97
      %s98 = sphi 0, %s95
      %s99 = sphi 0, %s98
      %s115 = sphi 0, %s99
    $region4: #{tpu_custom_call.1} parent=1 // loop_header_branch
      %20 = sbr.rel (%p18) target = $region8
    $region5: #{tpu_custom_call.1} parent=1 // loop_body
      %s22 = ssub.s32 %s17, 1
      %s23 = ssub.s32 %s17, 2
      %s30 = sadd.s32 1, %s25
      %p31 = scmp.ge.s32.totalorder %s30, 1
      %s32 = scalar_select %p31, 0, %s30
      %s33 = sadd.s32 1, %s24
      %s34 = scalar_select %p31, %s33, %s24
      %p35 = scmp.ge.s32.totalorder %s34, 2
      %s36 = scalar_select %p35, 0, %s34
      %s37 = ssub.s32 %s24, %s36
      %s38 = ssub.s32 %s25, %s32
      %s39 = sor.u32 %s37, %s38
      %p40 = scmp.eq.s32.totalorder %s39, 0
      %s42 = sadd.s32 %s41, 1
      %s43 = scalar_select %p40, %s41, %s42
      %p46 = pneg %p40
      %p47 = scmp.eq.s32.totalorder %s17, 1
      %p48 = por %p46, %p47
      %p49 = scmp.ne.s32.totalorder %s41, %s44
      %p50 = scmp.eq.s32.totalorder %s17, 0
      %p51 = por %p49, %p50
      %p52 = scmp.ne.s32.totalorder %s41, %s44
      %p53 = scmp.eq.s32.totalorder %s22, 1
      %p54 = por %p52, %p53
      %p55 = scmp.ne.s32.totalorder %s44, %s45
      %p56 = scmp.eq.s32.totalorder %s22, 0
      %p57 = por %p55, %p56
      %p58 = scmp.ne.s32.totalorder %s44, %s45
      %p59 = scmp.eq.s32.totalorder %s23, 1
      %p60 = por %p58, %p59
      %p62 = scmp.ne.s32.totalorder %s45, %s61
      %p63 = scmp.eq.s32.totalorder %s23, 0
      %p64 = por %p62, %p63
      %s65 = ssub.s32 %s24, %s36
      %p66 = scmp.eq.s32.totalorder %s65, 0
      %s68 = sadd.s32 %s67, 1
      %s69 = scalar_select %p66, %s67, %s68
      %p72 = pneg %p66
      %p73 = scmp.eq.s32.totalorder %s17, 1
      %p74 = por %p72, %p73
      %p75 = scmp.ne.s32.totalorder %s67, %s70
      %p76 = scmp.eq.s32.totalorder %s17, 0
      %p77 = por %p75, %p76
      %p78 = scmp.ne.s32.totalorder %s67, %s70
      %p79 = scmp.eq.s32.totalorder %s22, 1
      %p80 = por %p78, %p79
      %p81 = scmp.ne.s32.totalorder %s70, %s71
      %p82 = scmp.eq.s32.totalorder %s22, 0
      %p83 = por %p81, %p82
      %p84 = scmp.ne.s32.totalorder %s70, %s71
      %p85 = scmp.eq.s32.totalorder %s23, 1
      %p86 = por %p84, %p85
      %p88 = scmp.ne.s32.totalorder %s71, %s87
      %p89 = scmp.eq.s32.totalorder %s23, 0
      %p90 = por %p88, %p89
      %s91 = ssub.s32 %s25, %s32
      %s92 = ssub.s32 %s24, %s36
      %s93 = sor.u32 %s91, %s92
      %p94 = scmp.eq.s32.totalorder %s93, 0
      %s96 = sadd.s32 %s95, 1
      %s97 = scalar_select %p94, %s95, %s96
      %p100 = pneg %p94
      %p101 = scmp.eq.s32.totalorder %s17, 1
      %p102 = por %p100, %p101
      %p103 = scmp.ne.s32.totalorder %s95, %s98
      %p104 = scmp.eq.s32.totalorder %s17, 0
      %p105 = por %p103, %p104
      %p106 = scmp.ne.s32.totalorder %s95, %s98
      %p107 = scmp.eq.s32.totalorder %s22, 1
      %p108 = por %p106, %p107
      %p109 = scmp.ne.s32.totalorder %s98, %s99
      %p110 = scmp.eq.s32.totalorder %s22, 0
      %p111 = por %p109, %p110
      %p112 = scmp.ne.s32.totalorder %s98, %s99
      %p113 = scmp.eq.s32.totalorder %s23, 1
      %p114 = por %p112, %p113
      %p116 = scmp.ne.s32.totalorder %s99, %s115
      %p117 = scmp.eq.s32.totalorder %s23, 0
      %p118 = por %p116, %p117
      %p119 = scmp.le.s32.totalorder 1, %s17
      %p120 = scmp.lt.s32.totalorder %s17, 3
      %p121 = pnand %p119, %p120
      %p122 = pneg %p121
      // Predicated region
      $region9: #{tpu_custom_call.1} parent=5 // pred_check
        _
      $region10: #{tpu_custom_call.1} parent=5 // pred_check_branch
        %124 = sbr.rel (%p121) target = $region12
      $region11: #{tpu_custom_call.1} parent=5 // pred_region
        %s125 = ssub.s32 %s17, 1
      $region12: #{tpu_custom_call.1} parent=5 // pred_fallthru
        _
      %p126 = scmp.lt.s32.totalorder %s17, 2
      // Predicated region
      $region13: #{tpu_custom_call.1} parent=5 // pred_check
        %p127 = pneg %p126
      $region14: #{tpu_custom_call.1} parent=5 // pred_check_branch
        %129 = sbr.rel (%p127) target = $region16
      $region15: #{tpu_custom_call.1} parent=5 // pred_region
        // Predicated region
        $region17: #{tpu_custom_call.1} parent=15 // pred_check
          %p130 = pneg %p51
        $region18: #{tpu_custom_call.1} parent=15 // pred_check_branch
          %132 = sbr.rel (%p130) target = $region20
        $region19: #{tpu_custom_call.1} parent=15 // pred_region
          %s133 = sand.u32 %s41, 1
          %s134 = scalar_lea.sflag [#allocation3], %s133
          %s135 = sand.u32 %s41, 1
          %s136 = smul.addr %s135, 8
          %s137 = scalar_lea.vmem [#allocation2], %s136
          %s139 = ssub.s32 128, 128
          %140 = vsyncadd %s134, %s139
          %s141 = sadd.s32 %s25, %s24
          %s142 = smul.addr %s141, 128
          %s143 = scalar_lea.hbm %s0, %s142
          %s145 = sshll.u32 %s137, 4
          %s146 = int_to_ptr.vmem [resolvable:$true] %s145
          %148 = dma.hbm_to_vmem [thread:$0]  %s143, 128, %s146, %s134
        $region20: #{tpu_custom_call.1} parent=15 // pred_fallthru
          _
        // Predicated region
        $region21: #{tpu_custom_call.1} parent=15 // pred_check
          %p149 = pneg %p77
        $region22: #{tpu_custom_call.1} parent=15 // pred_check_branch
          %151 = sbr.rel (%p149) target = $region24
        $region23: #{tpu_custom_call.1} parent=15 // pred_region
          %s152 = sand.u32 %s67, 1
          %s153 = scalar_lea.sflag [#allocation6], %s152
          %s154 = sand.u32 %s67, 1
          %s155 = smul.addr %s154, 4
          %s156 = scalar_lea.vmem [#allocation5], %s155
          %s158 = ssub.s32 64, 64
          %159 = vsyncadd %s153, %s158
          %s160 = smul.addr %s24, 64
          %s161 = scalar_lea.hbm %s1, %s160
          %s163 = sshll.u32 %s156, 4
          %s164 = int_to_ptr.vmem [resolvable:$true] %s163
          %166 = dma.hbm_to_vmem [thread:$0]  %s161, 64, %s164, %s153
        $region24: #{tpu_custom_call.1} parent=15 // pred_fallthru
          _
      $region16: #{tpu_custom_call.1} parent=5 // pred_fallthru
        _
      %p167 = scmp.le.s32.totalorder 1, %s17
      %p168 = scmp.lt.s32.totalorder %s17, 3
      %p169 = pnand %p167, %p168
      %p170 = pneg %p169
      // Predicated region
      $region25: #{tpu_custom_call.1} parent=5 // pred_check
        _
      $region26: #{tpu_custom_call.1} parent=5 // pred_check_branch
        %172 = sbr.rel (%p169) target = $region28
      $region27: #{tpu_custom_call.1} parent=5 // pred_region
        %s173 = ssub.s32 %s17, 1
        %s174 = sand.u32 %s44, 1
        %s175 = scalar_lea.sflag [#allocation3], %s174
        %s176 = sand.u32 %s44, 1
        %s177 = smul.addr %s176, 8
        %s178 = scalar_lea.vmem [#allocation2], %s177
        // Predicated region
        $region29: #{tpu_custom_call.1} parent=27 // pred_check
          %p179 = pneg %p57
        $region30: #{tpu_custom_call.1} parent=27 // pred_check_branch
          %181 = sbr.rel (%p179) target = $region32
        $region31: #{tpu_custom_call.1} parent=27 // pred_region
          %182 = dma.done %s175, 128
        $region32: #{tpu_custom_call.1} parent=27 // pred_fallthru
          _
        %s183 = sand.u32 %s70, 1
        %s184 = scalar_lea.sflag [#allocation6], %s183
        %s185 = sand.u32 %s70, 1
        %s186 = smul.addr %s185, 4
        %s187 = scalar_lea.vmem [#allocation5], %s186
        // Predicated region
        $region33: #{tpu_custom_call.1} parent=27 // pred_check
          %p188 = pneg %p83
        $region34: #{tpu_custom_call.1} parent=27 // pred_check_branch
          %190 = sbr.rel (%p188) target = $region36
        $region35: #{tpu_custom_call.1} parent=27 // pred_region
          %191 = dma.done %s184, 64
        $region36: #{tpu_custom_call.1} parent=27 // pred_fallthru
          _
        %s192 = sand.u32 %s44, 1
        %s193 = scalar_lea.sflag [#allocation3], %s192
        %s194 = sand.u32 %s44, 1
        %s195 = smul.addr %s194, 8
        %s196 = scalar_lea.vmem [#allocation2], %s195
        %p197 = pneg %p57
        %p198 = pneg %p54
        %s199 = sand.u32 %s70, 1
        %s200 = scalar_lea.sflag [#allocation6], %s199
        %s201 = sand.u32 %s70, 1
        %s202 = smul.addr %s201, 4
        %s203 = scalar_lea.vmem [#allocation5], %s202
        %p204 = pneg %p83
        %p205 = pneg %p80
        %p206 = pneg %p111
        %p207 = pneg %p108
        %s208 = sand.u32 %s98, 1
        %s209 = scalar_lea.sflag [#allocation4], %s208
        %s210 = sand.u32 %s98, 1
        %s211 = smul.addr %s210, 8
        %s212 = scalar_lea.vmem [#allocation7], %s211
        %v213 = vld [vmem:[%s178] sm:$0xff]
        %v214 = vld [vmem:[%s187] sm:$0x7]
        %vm215 = vcmask 23552
        %v217 = vsel %vm215, %v213, 0
        %vm219 = vcmask 1042432
        %v221 = vsel %vm219, %v214, 0
        %223 = vmatprep.subr.mxu0 0.0
        %224 = vmatpush1.msra.mxu0 %v221
        %225 = vmatprep.subr.mxu0 0.0
        %226 = vmatpush1.msra.mxu0 0.0
        %227 = vmatprep.subr.mxu0 0.0
        %228 = vmatpush1.msra.mxu0 0.0
        %229 = vmatprep.subr.mxu0 0.0
        %230 = vmatpush1.msra.mxu0 0.0
        %231 = vmatprep.subr.mxu0 0.0
        %232 = vmatpush1.msra.mxu0 0.0
        %233 = vmatprep.subr.mxu0 0.0
        %234 = vmatpush1.msra.mxu0 0.0
        %235 = vmatprep.subr.mxu0 0.0
        %236 = vmatpush1.msra.mxu0 0.0
        %237 = vmatprep.subr.mxu0 0.0
        %238 = vmatpush1.msra.mxu0 0.0
        %239 = vmatprep.subr.mxu0 0.0
        %240 = vmatpush1.msra.mxu0 0.0
        %241 = vmatprep.subr.mxu0 0.0
        %242 = vmatpush1.msra.mxu0 0.0
        %243 = vmatprep.subr.mxu0 0.0
        %244 = vmatpush1.msra.mxu0 0.0
        %245 = vmatprep.subr.mxu0 0.0
        %246 = vmatpush1.msra.mxu0 0.0
        %247 = vmatprep.subr.mxu0 0.0
        %248 = vmatpush1.msra.mxu0 0.0
        %249 = vmatprep.subr.mxu0 0.0
        %250 = vmatpush1.msra.mxu0 0.0
        %251 = vmatprep.subr.mxu0 0.0
        %252 = vmatpush1.msra.mxu0 0.0
        %253 = vmatprep.subr.mxu0 0.0
        %254 = vmatpush1.msra.mxu0 0.0
        %255 = vmatprep.subr.mxu0 0.0
        %256 = vmatpush1.msra.mxu0 0.0
        %257 = vmatprep.subr.mxu0 0.0
        %258 = vmatpush1.msra.mxu0 0.0
        %259 = vmatprep.subr.mxu0 0.0
        %260 = vmatpush1.msra.mxu0 0.0
        %261 = vmatprep.subr.mxu0 0.0
        %262 = vmatpush1.msra.mxu0 0.0
        %263 = vmatprep.subr.mxu0 0.0
        %264 = vmatpush1.msra.mxu0 0.0
        %265 = vmatprep.subr.mxu0 0.0
        %266 = vmatpush1.msra.mxu0 0.0
        %267 = vmatprep.subr.mxu0 0.0
        %268 = vmatpush1.msra.mxu0 0.0
        %269 = vmatprep.subr.mxu0 0.0
        %270 = vmatpush1.msra.mxu0 0.0
        %271 = vmatprep.subr.mxu0 0.0
        %272 = vmatpush1.msra.mxu0 0.0
        %273 = vmatprep.subr.mxu0 0.0
        %274 = vmatpush1.msra.mxu0 0.0
        %275 = vmatprep.subr.mxu0 0.0
        %276 = vmatpush1.msra.mxu0 0.0
        %277 = vmatprep.subr.mxu0 0.0
        %278 = vmatpush1.msra.mxu0 0.0
        %279 = vmatprep.subr.mxu0 0.0
        %280 = vmatpush1.msra.mxu0 0.0
        %281 = vmatprep.subr.mxu0 0.0
        %282 = vmatpush1.msra.mxu0 0.0
        %283 = vmatprep.subr.mxu0 0.0
        %284 = vmatpush1.msra.mxu0 0.0
        %285 = vmatprep.subr.mxu0 0.0
        %286 = vmatpush1.msra.mxu0 0.0
        %287 = vmatprep.mubr.f32.mxu0 0.0
        %288 = vmatmul.mubr.f32.gmra.mrb[0].mxu0 %v217
        %v289 = vpop.f32.mrb[0].mxu0
        %v290 = vadd.f32 0.0, %v289
        %v291 = vpop.f32.mrb[0].mxu0
        %292 = vdwg.mxu0
        %293 = vst [vmem:[%s212] sm:$0xff] %v290
        %s294 = sand.u32 %s98, 1
        %s295 = scalar_lea.sflag [#allocation4], %s294
        %s296 = sand.u32 %s98, 1
        %s297 = smul.addr %s296, 8
        %s298 = scalar_lea.vmem [#allocation7], %s297
        // Predicated region
        $region37: #{tpu_custom_call.1} parent=27 // pred_check
          %p299 = pneg %p108
        $region38: #{tpu_custom_call.1} parent=27 // pred_check_branch
          %301 = sbr.rel (%p299) target = $region40
        $region39: #{tpu_custom_call.1} parent=27 // pred_region
          %s303 = ssub.s32 128, 128
          %304 = vsyncadd %s295, %s303
          %s305 = smul.addr %s27, 2
          %s306 = sadd.s32 %s26, %s305
          %s307 = smul.addr %s306, 128
          %s308 = scalar_lea.hbm %s2, %s307
          %s310 = sshll.u32 %s298, 4
          %s311 = int_to_ptr.vmem [resolvable:$true] %s310
          %313 = dma.vmem_to_hbm [thread:$0]  %s311, 128, %s308, %s295
        $region40: #{tpu_custom_call.1} parent=27 // pred_fallthru
          _
      $region28: #{tpu_custom_call.1} parent=5 // pred_fallthru
        _
      %p314 = scmp.le.s32.totalorder 2, %s17
      // Predicated region
      $region41: #{tpu_custom_call.1} parent=5 // pred_check
        %p315 = pneg %p314
      $region42: #{tpu_custom_call.1} parent=5 // pred_check_branch
        %317 = sbr.rel (%p315) target = $region44
      $region43: #{tpu_custom_call.1} parent=5 // pred_region
        %s318 = ssub.s32 %s17, 2
        // Predicated region
        $region45: #{tpu_custom_call.1} parent=43 // pred_check
          %p319 = pneg %p114
        $region46: #{tpu_custom_call.1} parent=43 // pred_check_branch
          %321 = sbr.rel (%p319) target = $region48
        $region47: #{tpu_custom_call.1} parent=43 // pred_region
          %s322 = sand.u32 %s99, 1
          %s323 = scalar_lea.sflag [#allocation4], %s322
          %s324 = sand.u32 %s99, 1
          %s325 = smul.addr %s324, 8
          %s326 = scalar_lea.vmem [#allocation7], %s325
          %327 = dma.done %s323, 128
        $region48: #{tpu_custom_call.1} parent=43 // pred_fallthru
          _
      $region44: #{tpu_custom_call.1} parent=5 // pred_fallthru
        _
    $region6: #{tpu_custom_call.1} parent=1 // loop_footer
      %s21 = sadd.s32 1, %s17
    $region7: #{tpu_custom_call.1} parent=1 // loop_footer_branch
      %16 = sbr.rel target = $region3
    $region8: #{tpu_custom_call.1} parent=1 // loop_exit
      _
    %328 = vsyncpa [#allocation3], 1
    %s329 = scalar_lea.sflag [#allocation3], 1
    %330 = vsyncpa %s329, 1
    %331 = vsyncpa [#allocation6], 1
    %s332 = scalar_lea.sflag [#allocation6], 1
    %333 = vsyncpa %s332, 1
    %334 = vsyncpa [#allocation4], 1
    %s335 = scalar_lea.sflag [#allocation4], 1
    %336 = vsyncpa %s335, 1

</llo_original>
